<compile_context>
chip_gen: v6e
topology: v6e:2x2x1
jax: 0.10.0
libtpu: 0.0.40
codegen_flags: <defaults>
</compile_context>

<pallas_src>
import math

import jax
import jax.numpy as jnp
from jax import lax
from jax.experimental import pallas as pl
from jax.experimental.pallas import tpu as pltpu

_SUBLANES = 8
_LANES = 128
_MIN_ROWS = 8          # minimum (f32-tile) row granularity
_CHUNK_ROWS = 512      # in-kernel accumulation chunk (256 KiB f32 temporaries)


def _cdiv(a, b):
    return -(-a // b)


def _phys_vmem_bytes():
    """Best-effort physical VMEM query; conservative (v7x-sized) fallback."""
    try:
        info = pltpu.get_tpu_info()
        for attr in ("vmem_capacity_bytes", "vmem_bytes", "vmem_size_bytes"):
            v = getattr(info, attr, None)
            if v:
                return int(v)
    except Exception:
        pass
    return 64 * 1024 * 1024


def _plan(n_elems, n_streams, max_itemsize):
    """Pick (n_splits, g, block_rows, chunk_rows, vmem_limit) for a group.

    Returns None if the input is too small to be worth a kernel launch."""
    rows_avail = n_elems // _LANES
    if rows_avail < _MIN_ROWS:
        return None

    phys = _phys_vmem_bytes()
    if phys >= 100 * 1024 * 1024:          # v5e / v6e class: 128 MiB physical
        stream_budget = 56 * 1024 * 1024
        vmem_limit = 80 * 1024 * 1024
        max_block_rows = 8192              # 4 MiB per f32 buffer
    else:                                   # v7x class: 64 MiB physical
        stream_budget = 26 * 1024 * 1024
        vmem_limit = 44 * 1024 * 1024
        max_block_rows = 4096              # 2 MiB per f32 buffer

    per_buf = stream_budget // (n_streams * 2)          # double-buffered
    cap = max(_MIN_ROWS, per_buf // (_LANES * max_itemsize))
    cap = min(cap, max_block_rows)

    # Split rows across both TensorCores when there is enough work.
    n_splits = 2 if rows_avail >= 64 else 1
    per_core = rows_avail // n_splits

    g = _cdiv(per_core, cap)                 # grid steps per core (balanced)
    block_rows = per_core // g
    if block_rows >= 1024:
        align = _CHUNK_ROWS                  # whole chunks -> clean fori_loop
    elif block_rows >= 32:
        align = 32                           # dense for bf16 / int8 tiles
    else:
        align = _MIN_ROWS
    block_rows = max(_MIN_ROWS, (block_rows // align) * align)
    g = per_core // block_rows               # re-pack leftover into more steps

    chunk_rows = _CHUNK_ROWS if block_rows >= _CHUNK_ROWS else block_rows
    return n_splits, g, block_rows, chunk_rows, vmem_limit


def _make_kernel(mask_flags, block_rows, chunk_rows):
    """Fused kernel for len(mask_flags) pairs sharing one element count.
    Inputs per pair: a, b[, m]; one resident f32 accumulator output block."""
    n_in = sum(3 if f else 2 for f in mask_flags)
    n_chunks = block_rows // chunk_rows
    rem_rows = block_rows - n_chunks * chunk_rows

    def _accum_chunk(in_refs, out_ref, start, rows):
        idx = 0
        for p, has_mask in enumerate(mask_flags):
            a = in_refs[idx][pl.ds(start, rows), :].astype(jnp.float32)
            b = in_refs[idx + 1][pl.ds(start, rows), :].astype(jnp.float32)
            idx += 2
            d = a - b
            if has_mask:
                m = in_refs[idx][pl.ds(start, rows), :].astype(jnp.float32)
                idx += 1
                d = d * m
                bm = b * m
            else:
                bm = b
            # (rows,128) -> (rows/8, 8, 128) is tile-aligned; leading-axis sum
            # into an (8,128) f32 partial is pure VPU work.
            num = jnp.sum((d * d).reshape(rows // _SUBLANES, _SUBLANES, _LANES),
                          axis=0)
            den = jnp.sum((bm * bm).reshape(rows // _SUBLANES, _SUBLANES, _LANES),
                          axis=0)
            out_ref[0, 2 * p] += num
            out_ref[0, 2 * p + 1] += den

    def kernel(*refs):
        in_refs = refs[:n_in]
        out_ref = refs[n_in]   # (1, 2*n_pairs, 8, 128) f32, resident per core

        @pl.when(pl.program_id(1) == 0)
        def _init():
            out_ref[...] = jnp.zeros_like(out_ref)

        if n_chunks == 1:
            _accum_chunk(in_refs, out_ref, 0, chunk_rows)
        elif n_chunks > 1:
            def body(ci, carry):
                start = pl.multiple_of(ci * chunk_rows, chunk_rows)
                _accum_chunk(in_refs, out_ref, start, chunk_rows)
                return carry
            lax.fori_loop(0, n_chunks, body, 0)
        if rem_rows:
            _accum_chunk(in_refs, out_ref, n_chunks * chunk_rows, rem_rows)

    return kernel


def _jnp_pair_sums(a, b, m):
    """Tiny-jnp fallback / ragged-tail reduction for one pair."""
    a = a.astype(jnp.float32)
    b = b.astype(jnp.float32)
    d = a - b
    if m is not None:
        m = m.astype(jnp.float32)
        d = d * m
        bm = b * m
    else:
        bm = b
    return jnp.sum(d * d), jnp.sum(bm * bm)


def _fused_norm_sums(pairs):
    """pairs: list of (a, b, mask_or_None), all with the SAME element count.
    Returns f32 array (2*n_pairs,) = [num0, den0, num1, den1, ...]."""
    n_pairs = len(pairs)
    shape = pairs[0][0].shape
    n_elems = int(math.prod(shape)) if shape else 1
    mask_flags = tuple(m is not None for _, _, m in pairs)
    n_streams = sum(3 if f else 2 for f in mask_flags)
    max_itemsize = max(x.dtype.itemsize for tpl in pairs for x in tpl
                       if x is not None)

    flats = [(jnp.ravel(a), jnp.ravel(b),
              jnp.ravel(m) if m is not None else None) for a, b, m in pairs]

    plan = _plan(n_elems, n_streams, max_itemsize)
    if plan is None:
        # Too small to amortize a kernel launch: plain jnp reduction.
        sums = []
        for fa, fb, fm in flats:
            sums.extend(_jnp_pair_sums(fa, fb, fm))
        return jnp.stack(sums)

    n_splits, g, block_rows, chunk_rows, vmem_limit = plan
    main_rows = n_splits * g * block_rows
    main = main_rows * _LANES

    def _main_view(x):
        xm = x if main == x.shape[0] else x[:main]
        return xm.reshape(main_rows, _LANES)

    inputs = []
    for fa, fb, fm in flats:
        inputs.append(_main_view(fa))
        inputs.append(_main_view(fb))
        if fm is not None:
            inputs.append(_main_view(fm))

    in_spec = pl.BlockSpec((block_rows, _LANES), lambda c, i: (c * g + i, 0))
    out_spec = pl.BlockSpec((1, 2 * n_pairs, _SUBLANES, _LANES),
                            lambda c, i: (c, 0, 0, 0))

    out = pl.pallas_call(
        _make_kernel(mask_flags, block_rows, chunk_rows),
        out_shape=jax.ShapeDtypeStruct(
            (n_splits, 2 * n_pairs, _SUBLANES, _LANES), jnp.float32),
        grid=(n_splits, g),
        in_specs=[in_spec] * len(inputs),
        out_specs=out_spec,
        compiler_params=pltpu.CompilerParams(
            dimension_semantics=("parallel", "arbitrary"),
            vmem_limit_bytes=vmem_limit),
    )(*inputs)

    # Tiny cross-core / cross-lane reduce of the (n_splits, 2P, 8, 128) partials.
    sums = jnp.sum(out, axis=(0, 2, 3))

    if main < n_elems:
        tails = []
        for fa, fb, fm in flats:
            tails.extend(_jnp_pair_sums(
                fa[main:], fb[main:], fm[main:] if fm is not None else None))
        sums = sums + jnp.stack(tails)
    return sums


def _prepare_pair(a, b, mask):
    """Broadcast a/b (and mask) to a common shape; narrow bool masks to int8."""
    shape = jnp.broadcast_shapes(jnp.shape(a), jnp.shape(b))
    if mask is not None:
        if mask.dtype == jnp.bool_:
            mask = mask.astype(jnp.int8)   # 1-byte mask stream; f32 cast in-VMEM
        shape = jnp.broadcast_shapes(shape, jnp.shape(mask))
        mask = jnp.broadcast_to(mask, shape)
    a = jnp.broadcast_to(a, shape)
    b = jnp.broadcast_to(b, shape)
    cnt = int(math.prod(shape)) if shape else 1
    return a, b, mask, cnt


def multi_norm_ratio(pairs_and_masks):
    """pairs_and_masks: list of (a, b, mask_or_None).
    Returns list of scalar f32 ratios ||(a-b)*m||^2 / ||b*m||^2; pairs sharing
    an element count are fused into a single pallas_call."""
    prepared = [_prepare_pair(a, b, m) for (a, b, m) in pairs_and_masks]
    groups = {}
    for i, (a, b, m, cnt) in enumerate(prepared):
        groups.setdefault(cnt, []).append((i, (a, b, m)))

    ratios = [None] * len(prepared)
    for _, items in groups.items():
        sums = _fused_norm_sums([t for _, t in items])
        for j, (i, _) in enumerate(items):
            ratios[i] = sums[2 * j] / sums[2 * j + 1]
    return ratios


class InversionMultiLoss:
    """JAX/Pallas re-implementation of the PyTorch InversionMultiLoss forward."""

    def __init__(self, loss_name='allRepr', patch_index=1):
        self.loss_name = loss_name
        self.patch_index = patch_index

    def __call__(self, attn_alpha, attr_mask=None, norm2_mask=None, *args):
        n = len(args)
        if 3 <= n < 5:
            if attr_mask is not None:
                r = multi_norm_ratio([(args[0], args[1], attr_mask),
                                      (args[2], args[3], norm2_mask)])
            else:
                r = multi_norm_ratio([(args[0], args[1], None),
                                      (args[2], args[3], None)])
            return r[0] + r[1] * attn_alpha
        elif n < 3:
            r = multi_norm_ratio([(args[0], args[1], None)])
            return r[0]
        else:
            # Mirrors PyTorch: exactly 5 args raises IndexError on args[5].
            r = multi_norm_ratio([(args[0], args[1], None),
                                  (args[2], args[3], None),
                                  (args[4], args[5], None)])
            return r[0] + r[1] * attn_alpha + r[2] * attn_alpha


def _ref_norm_ratio(a, b, mask=None):
    a = a.astype(jnp.float32)
    b = b.astype(jnp.float32)
    if mask is None:
        num = jnp.sum(jnp.square(a - b))
        den = jnp.sum(jnp.square(b))
    else:
        m = mask.astype(jnp.float32)
        num = jnp.sum(jnp.square((a - b) * m))
        den = jnp.sum(jnp.square(b * m))
    return num / den


if __name__ == "__main__":
    key = jax.random.PRNGKey(0)
    ks = jax.random.split(key, 14)

    # Small NCHW feature maps consistent with the module's usage.
    shape = (2, 4, 16, 16)
    a0 = jax.random.normal(ks[0], shape, jnp.float32)
    a1 = jax.random.normal(ks[1], shape, jnp.float32) + 0.5
    a2 = jax.random.normal(ks[2], shape, jnp.float32)
    a3 = jax.random.normal(ks[3], shape, jnp.float32) - 0.25
    a4 = jax.random.normal(ks[4], shape, jnp.float32)
    a5 = jax.random.normal(ks[5], shape, jnp.float32) + 1.0

    # Boolean masks (streamed to the kernel as 1-byte int8).
    attr_mask = jax.random.uniform(ks[6], shape) > 0.5
    norm2_mask = jax.random.uniform(ks[7], shape) > 0.5

    # Ragged bf16 pair: exercises in-kernel casting + the jnp tail path.
    shape2 = (2, 3, 16, 16)
    b0 = jax.random.normal(ks[8], shape2, jnp.bfloat16)
    b1 = (jax.random.normal(ks[9], shape2, jnp.float32) + 0.75).astype(jnp.bfloat16)

    # Larger pairs: exercise the dual-core grid split, the chunked fori_loop
    # accumulation and the remainder-chunk / ragged-tail code paths.
    shape3 = (2, 8, 128, 128)
    c0 = jax.random.normal(ks[10], shape3, jnp.float32)
    c1 = jax.random.normal(ks[11], shape3, jnp.float32) + 0.1
    shape4 = (2, 5, 160, 160)
    c2 = jax.random.normal(ks[12], shape4, jnp.float32)
    c3 = jax.random.normal(ks[13], shape4, jnp.float32) - 0.3

    attn_alpha = jnp.float32(0.3)
    loss = InversionMultiLoss()

    out_masked   = loss(attn_alpha, attr_mask, norm2_mask, a0, a1, a2, a3)  # 4 args, masks
    out_unmasked = loss(attn_alpha, None, None, a0, a1, a2, a3)             # 4 args, no masks
    out_pair     = loss(attn_alpha, None, None, a0, a1)                     # 2 args
    out_six      = loss(attn_alpha, None, None, a0, a1, a2, a3, a4, a5)     # 6 args
    out_mixed    = loss(attn_alpha, None, None, a0, a1, b0, b1)             # mixed shapes/dtypes
    out_big      = loss(attn_alpha, None, None, c0, c1, c2, c3)             # large, dual-core path

    results = jax.block_until_ready(
        (out_masked, out_unmasked, out_pair, out_six, out_mixed, out_big))

    ref_masked = (_ref_norm_ratio(a0, a1, attr_mask)
                  + _ref_norm_ratio(a2, a3, norm2_mask) * attn_alpha)
    ref_unmasked = (_ref_norm_ratio(a0, a1)
                    + _ref_norm_ratio(a2, a3) * attn_alpha)
    ref_pair = _ref_norm_ratio(a0, a1)
    ref_six = (_ref_norm_ratio(a0, a1)
               + _ref_norm_ratio(a2, a3) * attn_alpha
               + _ref_norm_ratio(a4, a5) * attn_alpha)
    ref_mixed = (_ref_norm_ratio(a0, a1)
                 + _ref_norm_ratio(b0, b1) * attn_alpha)
    ref_big = (_ref_norm_ratio(c0, c1)
               + _ref_norm_ratio(c2, c3) * attn_alpha)

    refs = (ref_masked, ref_unmasked, ref_pair, ref_six, ref_mixed, ref_big)
    for got, ref in zip(results, refs):
        assert jnp.allclose(got, ref, rtol=1e-4, atol=1e-5), (got, ref)

    print("KERNEL_OK")
</pallas_src>

<mosaic_0001>
module attributes {stable_mosaic.version = 11 : i64} {
  func.func @kernel(%arg0: i32, %arg1: i32, %arg2: memref<16x128xf32, #tpu.memory_space<vmem>>, %arg3: memref<16x128xf32, #tpu.memory_space<vmem>>, %arg4: memref<16x128xi8, #tpu.memory_space<vmem>>, %arg5: memref<16x128xf32, #tpu.memory_space<vmem>>, %arg6: memref<16x128xf32, #tpu.memory_space<vmem>>, %arg7: memref<16x128xi8, #tpu.memory_space<vmem>>, %arg8: memref<1x4x8x128xf32, #tpu.memory_space<vmem>>) attributes {dimension_semantics = [#tpu.dimension_semantics<parallel>, #tpu.dimension_semantics<arbitrary>], iteration_bounds = array<i64: 1, 1>, scalar_prefetch = 0 : i64, scratch_operands = 0 : i64, tpu.core_type = #tpu.core_type<tc>, window_params = [{transform_indices = @transform_0, window_bounds = array<i64: 16, 128>}, {transform_indices = @transform_1, window_bounds = array<i64: 16, 128>}, {transform_indices = @transform_2, window_bounds = array<i64: 16, 128>}, {transform_indices = @transform_3, window_bounds = array<i64: 16, 128>}, {transform_indices = @transform_4, window_bounds = array<i64: 16, 128>}, {transform_indices = @transform_5, window_bounds = array<i64: 16, 128>}, {transform_indices = @transform_6, window_bounds = array<i64: 1, 4, 8, 128>}]} {
    %c0_i32 = arith.constant 0 : i32
    %0 = arith.cmpi eq, %arg1, %c0_i32 : i32
    %1 = arith.extui %0 : i1 to i32
    %c0_i32_0 = arith.constant 0 : i32
    %2 = arith.cmpi ne, %1, %c0_i32_0 : i32
    scf.if %2 {
      %cst_44 = arith.constant 0.000000e+00 : f32
      %53 = vector.broadcast %cst_44 : f32 to vector<1x4x8x128xf32>
      %c0_45 = arith.constant 0 : index
      %c0_46 = arith.constant 0 : index
      %c0_47 = arith.constant 0 : index
      %c0_48 = arith.constant 0 : index
      %54 = vector.load %arg8[%c0_45, %c0_46, %c0_47, %c0_48] : memref<1x4x8x128xf32, #tpu.memory_space<vmem>>, vector<1x4x8x128xf32>
      tpu.vector_store %arg8[%c0_45, %c0_46, %c0_47, %c0_48], %53 {strides = array<i32>} : memref<1x4x8x128xf32, #tpu.memory_space<vmem>>, vector<1x4x8x128xf32>,
    } else {
    }
    %c0 = arith.constant 0 : index
    %c0_1 = arith.constant 0 : index
    %3 = vector.load %arg2[%c0, %c0_1] : memref<16x128xf32, #tpu.memory_space<vmem>>, vector<16x128xf32>
    %c0_2 = arith.constant 0 : index
    %c0_3 = arith.constant 0 : index
    %4 = vector.load %arg3[%c0_2, %c0_3] : memref<16x128xf32, #tpu.memory_space<vmem>>, vector<16x128xf32>
    %5 = arith.subf %3, %4 : vector<16x128xf32>
    %c0_4 = arith.constant 0 : index
    %c0_5 = arith.constant 0 : index
    %6 = vector.load %arg4[%c0_4, %c0_5] : memref<16x128xi8, #tpu.memory_space<vmem>>, vector<16x128xi8>
    %7 = arith.sitofp %6 : vector<16x128xi8> to vector<16x128xf32>
    %8 = arith.mulf %5, %7 : vector<16x128xf32>
    %9 = arith.mulf %4, %7 : vector<16x128xf32>
    %10 = arith.mulf %8, %8 : vector<16x128xf32>
    %11 = vector.shape_cast %10 : vector<16x128xf32> to vector<2x8x128xf32>
    %cst = arith.constant dense<0.000000e+00> : vector<8x128xf32>
    %12 = vector.multi_reduction <add>, %11, %cst [0] : vector<2x8x128xf32> to vector<8x128xf32>
    %13 = arith.mulf %9, %9 : vector<16x128xf32>
    %14 = vector.shape_cast %13 : vector<16x128xf32> to vector<2x8x128xf32>
    %cst_6 = arith.constant dense<0.000000e+00> : vector<8x128xf32>
    %15 = vector.multi_reduction <add>, %14, %cst_6 [0] : vector<2x8x128xf32> to vector<8x128xf32>
    %c0_7 = arith.constant 0 : index
    %c0_8 = arith.constant 0 : index
    %c0_9 = arith.constant 0 : index
    %c0_10 = arith.constant 0 : index
    %16 = vector.load %arg8[%c0_7, %c0_8, %c0_9, %c0_10] : memref<1x4x8x128xf32, #tpu.memory_space<vmem>>, vector<1x1x8x128xf32>
    %17 = vector.shape_cast %16 : vector<1x1x8x128xf32> to vector<8x128xf32>
    %18 = arith.addf %17, %12 : vector<8x128xf32>
    %c0_11 = arith.constant 0 : index
    %c0_12 = arith.constant 0 : index
    %c0_13 = arith.constant 0 : index
    %c0_14 = arith.constant 0 : index
    %19 = vector.load %arg8[%c0_11, %c0_12, %c0_13, %c0_14] : memref<1x4x8x128xf32, #tpu.memory_space<vmem>>, vector<1x1x8x128xf32>
    %20 = vector.shape_cast %19 : vector<1x1x8x128xf32> to vector<8x128xf32>
    %21 = vector.shape_cast %18 : vector<8x128xf32> to vector<1x1x8x128xf32>
    tpu.vector_store %arg8[%c0_11, %c0_12, %c0_13, %c0_14], %21 {strides = array<i32>} : memref<1x4x8x128xf32, #tpu.memory_space<vmem>>, vector<1x1x8x128xf32>,
    %c0_15 = arith.constant 0 : index
    %c1 = arith.constant 1 : index
    %c0_16 = arith.constant 0 : index
    %c0_17 = arith.constant 0 : index
    %22 = vector.load %arg8[%c0_15, %c1, %c0_16, %c0_17] : memref<1x4x8x128xf32, #tpu.memory_space<vmem>>, vector<1x1x8x128xf32>
    %23 = vector.shape_cast %22 : vector<1x1x8x128xf32> to vector<8x128xf32>
    %24 = arith.addf %23, %15 : vector<8x128xf32>
    %c0_18 = arith.constant 0 : index
    %c1_19 = arith.constant 1 : index
    %c0_20 = arith.constant 0 : index
    %c0_21 = arith.constant 0 : index
    %25 = vector.load %arg8[%c0_18, %c1_19, %c0_20, %c0_21] : memref<1x4x8x128xf32, #tpu.memory_space<vmem>>, vector<1x1x8x128xf32>
    %26 = vector.shape_cast %25 : vector<1x1x8x128xf32> to vector<8x128xf32>
    %27 = vector.shape_cast %24 : vector<8x128xf32> to vector<1x1x8x128xf32>
    tpu.vector_store %arg8[%c0_18, %c1_19, %c0_20, %c0_21], %27 {strides = array<i32>} : memref<1x4x8x128xf32, #tpu.memory_space<vmem>>, vector<1x1x8x128xf32>,
    %c0_22 = arith.constant 0 : index
    %c0_23 = arith.constant 0 : index
    %28 = vector.load %arg5[%c0_22, %c0_23] : memref<16x128xf32, #tpu.memory_space<vmem>>, vector<16x128xf32>
    %c0_24 = arith.constant 0 : index
    %c0_25 = arith.constant 0 : index
    %29 = vector.load %arg6[%c0_24, %c0_25] : memref<16x128xf32, #tpu.memory_space<vmem>>, vector<16x128xf32>
    %30 = arith.subf %28, %29 : vector<16x128xf32>
    %c0_26 = arith.constant 0 : index
    %c0_27 = arith.constant 0 : index
    %31 = vector.load %arg7[%c0_26, %c0_27] : memref<16x128xi8, #tpu.memory_space<vmem>>, vector<16x128xi8>
    %32 = arith.sitofp %31 : vector<16x128xi8> to vector<16x128xf32>
    %33 = arith.mulf %30, %32 : vector<16x128xf32>
    %34 = arith.mulf %29, %32 : vector<16x128xf32>
    %35 = arith.mulf %33, %33 : vector<16x128xf32>
    %36 = vector.shape_cast %35 : vector<16x128xf32> to vector<2x8x128xf32>
    %cst_28 = arith.constant dense<0.000000e+00> : vector<8x128xf32>
    %37 = vector.multi_reduction <add>, %36, %cst_28 [0] : vector<2x8x128xf32> to vector<8x128xf32>
    %38 = arith.mulf %34, %34 : vector<16x128xf32>
    %39 = vector.shape_cast %38 : vector<16x128xf32> to vector<2x8x128xf32>
    %cst_29 = arith.constant dense<0.000000e+00> : vector<8x128xf32>
    %40 = vector.multi_reduction <add>, %39, %cst_29 [0] : vector<2x8x128xf32> to vector<8x128xf32>
    %c0_30 = arith.constant 0 : index
    %c2 = arith.constant 2 : index
    %c0_31 = arith.constant 0 : index
    %c0_32 = arith.constant 0 : index
    %41 = vector.load %arg8[%c0_30, %c2, %c0_31, %c0_32] : memref<1x4x8x128xf32, #tpu.memory_space<vmem>>, vector<1x1x8x128xf32>
    %42 = vector.shape_cast %41 : vector<1x1x8x128xf32> to vector<8x128xf32>
    %43 = arith.addf %42, %37 : vector<8x128xf32>
    %c0_33 = arith.constant 0 : index
    %c2_34 = arith.constant 2 : index
    %c0_35 = arith.constant 0 : index
    %c0_36 = arith.constant 0 : index
    %44 = vector.load %arg8[%c0_33, %c2_34, %c0_35, %c0_36] : memref<1x4x8x128xf32, #tpu.memory_space<vmem>>, vector<1x1x8x128xf32>
    %45 = vector.shape_cast %44 : vector<1x1x8x128xf32> to vector<8x128xf32>
    %46 = vector.shape_cast %43 : vector<8x128xf32> to vector<1x1x8x128xf32>
    tpu.vector_store %arg8[%c0_33, %c2_34, %c0_35, %c0_36], %46 {strides = array<i32>} : memref<1x4x8x128xf32, #tpu.memory_space<vmem>>, vector<1x1x8x128xf32>,
    %c0_37 = arith.constant 0 : index
    %c3 = arith.constant 3 : index
    %c0_38 = arith.constant 0 : index
    %c0_39 = arith.constant 0 : index
    %47 = vector.load %arg8[%c0_37, %c3, %c0_38, %c0_39] : memref<1x4x8x128xf32, #tpu.memory_space<vmem>>, vector<1x1x8x128xf32>
    %48 = vector.shape_cast %47 : vector<1x1x8x128xf32> to vector<8x128xf32>
    %49 = arith.addf %48, %40 : vector<8x128xf32>
    %c0_40 = arith.constant 0 : index
    %c3_41 = arith.constant 3 : index
    %c0_42 = arith.constant 0 : index
    %c0_43 = arith.constant 0 : index
    %50 = vector.load %arg8[%c0_40, %c3_41, %c0_42, %c0_43] : memref<1x4x8x128xf32, #tpu.memory_space<vmem>>, vector<1x1x8x128xf32>
    %51 = vector.shape_cast %50 : vector<1x1x8x128xf32> to vector<8x128xf32>
    %52 = vector.shape_cast %49 : vector<8x128xf32> to vector<1x1x8x128xf32>
    tpu.vector_store %arg8[%c0_40, %c3_41, %c0_42, %c0_43], %52 {strides = array<i32>} : memref<1x4x8x128xf32, #tpu.memory_space<vmem>>, vector<1x1x8x128xf32>,
    return
  }
  func.func @transform_0(%arg0: i32, %arg1: i32) -> (i32, i32) {
    %c1_i32 = arith.constant 1 : i32
    %0 = arith.muli %arg0, %c1_i32 : i32
    %1 = arith.addi %0, %arg1 : i32
    %c0_i32 = arith.constant 0 : i32
    %c0_i32_0 = arith.constant 0 : i32
    return %1, %c0_i32 : i32, i32
  }
  func.func @transform_1(%arg0: i32, %arg1: i32) -> (i32, i32) {
    %c1_i32 = arith.constant 1 : i32
    %0 = arith.muli %arg0, %c1_i32 : i32
    %1 = arith.addi %0, %arg1 : i32
    %c0_i32 = arith.constant 0 : i32
    %c0_i32_0 = arith.constant 0 : i32
    return %1, %c0_i32 : i32, i32
  }
  func.func @transform_2(%arg0: i32, %arg1: i32) -> (i32, i32) {
    %c1_i32 = arith.constant 1 : i32
    %0 = arith.muli %arg0, %c1_i32 : i32
    %1 = arith.addi %0, %arg1 : i32
    %c0_i32 = arith.constant 0 : i32
    %c0_i32_0 = arith.constant 0 : i32
    return %1, %c0_i32 : i32, i32
  }
  func.func @transform_3(%arg0: i32, %arg1: i32) -> (i32, i32) {
    %c1_i32 = arith.constant 1 : i32
    %0 = arith.muli %arg0, %c1_i32 : i32
    %1 = arith.addi %0, %arg1 : i32
    %c0_i32 = arith.constant 0 : i32
    %c0_i32_0 = arith.constant 0 : i32
    return %1, %c0_i32 : i32, i32
  }
  func.func @transform_4(%arg0: i32, %arg1: i32) -> (i32, i32) {
    %c1_i32 = arith.constant 1 : i32
    %0 = arith.muli %arg0, %c1_i32 : i32
    %1 = arith.addi %0, %arg1 : i32
    %c0_i32 = arith.constant 0 : i32
    %c0_i32_0 = arith.constant 0 : i32
    return %1, %c0_i32 : i32, i32
  }
  func.func @transform_5(%arg0: i32, %arg1: i32) -> (i32, i32) {
    %c1_i32 = arith.constant 1 : i32
    %0 = arith.muli %arg0, %c1_i32 : i32
    %1 = arith.addi %0, %arg1 : i32
    %c0_i32 = arith.constant 0 : i32
    %c0_i32_0 = arith.constant 0 : i32
    return %1, %c0_i32 : i32, i32
  }
  func.func @transform_6(%arg0: i32, %arg1: i32) -> (i32, i32, i32, i32) {
    %c0_i32 = arith.constant 0 : i32
    %c0_i32_0 = arith.constant 0 : i32
    %c0_i32_1 = arith.constant 0 : i32
    %c0_i32_2 = arith.constant 0 : i32
    return %arg0, %c0_i32, %c0_i32_0, %c0_i32_1 : i32, i32, i32, i32
  }
}

</mosaic_0001>

<llo_original>
// kernel: tpu_custom_call.1
$region0: #{tpu_custom_call.1}
  #allocation0 [shape = 'u32[]', space=smem, size = 0x4, offset = 0x4, fixed_abs, tag = 'smem constant byte address 0x4 - core index']
  #allocation1 [shape = 'u32[144,128]{1,0:T(1,128)}', space=vmem, size = 0x12000, scoped, tag = 'internal scratch']
  %s0 = inlined_call_operand.hbm [shape: f32[16,128], index: 0, kind: input, shape index: {}]
  %s1 = inlined_call_operand.hbm [shape: f32[16,128], index: 1, kind: input, shape index: {}]
  %s2 = inlined_call_operand.hbm [shape: s8[16,128], index: 2, kind: input, shape index: {}]
  %s3 = inlined_call_operand.hbm [shape: f32[16,128], index: 3, kind: input, shape index: {}]
  %s4 = inlined_call_operand.hbm [shape: f32[16,128], index: 4, kind: input, shape index: {}]
  %s5 = inlined_call_operand.vmem [shape: s8[16,128], index: 5, kind: input, shape index: {}]
  %s6 = inlined_call_operand.hbm [shape: f32[1,4,8,128], index: 6, kind: output, shape index: {}]
  %s7 = sld [smem:[#allocation0]]
  $region58: #{tpu_custom_call.1} parent=0
    _
  %s9 = ssub.s32 1, %s7
  %s10 = scalar_select 0, %s9, %s7
  $region1: #{tpu_custom_call.1} parent=0
    #allocation2 [shape = 'u8[8192]{0}', space=vmem, size = 0x2000, scoped, tag = 'input window, operand 0, single buffered']
    #allocation3 [shape = 's32[1]{0}', space=sflag, size = 0x4, scoped, tag = 'scoped memory for tpu_custom_call.1']
    #allocation4 [shape = 's32[1]{0}', space=sflag, size = 0x4, scoped, tag = 'scoped memory for tpu_custom_call.1']
    #allocation5 [shape = 'u8[8192]{0}', space=vmem, size = 0x2000, scoped, tag = 'input window, operand 1, single buffered']
    #allocation6 [shape = 's32[1]{0}', space=sflag, size = 0x4, scoped, tag = 'scoped memory for tpu_custom_call.1']
    #allocation7 [shape = 'u8[2048]{0}', space=vmem, size = 0x800, scoped, tag = 'input window, operand 2, single buffered']
    #allocation8 [shape = 'u8[8192]{0}', space=vmem, size = 0x2000, scoped, tag = 'input window, operand 3, single buffered']
    #allocation9 [shape = 's32[1]{0}', space=sflag, size = 0x4, scoped, tag = 'scoped memory for tpu_custom_call.1']
    #allocation10 [shape = 'u8[8192]{0}', space=vmem, size = 0x2000, scoped, tag = 'input window, operand 4, single buffered']
    #allocation11 [shape = 'u8[16384]{0}', space=vmem, size = 0x4000, scoped, tag = 'output window, operand 0, single buffered']
    %11 = vsyncpa [#allocation3], 0
    %12 = vsyncpa [#allocation6], 0
    %13 = vsyncpa [#allocation9], 0
    %14 = vsyncpa [#allocation4], 0
    // Predicated region
    $region2: #{tpu_custom_call.1} parent=1 // pred_check
      _
    $region3: #{tpu_custom_call.1} parent=1 // pred_check_branch
      %16 = sbr.rel (0) target = $region5
    $region4: #{tpu_custom_call.1} parent=1 // pred_region
      %s17 = sadd.s32 0, 0
      %s18 = smul.u32 2, %s17
      %s20 = ssub.s32 256, 256
      %21 = vsyncadd [#allocation3], %s20
      %s22 = smul.addr %s18, 128
      %s23 = scalar_lea.hbm %s0, %s22
      %s24 = sshll.u32 [#allocation2], 4
      %s25 = int_to_ptr.vmem [resolvable:$true] %s24
      %30 = dma.hbm_to_vmem [thread:$0]  %s23, 256, %s25, [#allocation3], 128, 128, 8
    $region5: #{tpu_custom_call.1} parent=1 // pred_fallthru
      _
    // Predicated region
    $region6: #{tpu_custom_call.1} parent=1 // pred_check
      _
    $region7: #{tpu_custom_call.1} parent=1 // pred_check_branch
      %32 = sbr.rel (0) target = $region9
    $region8: #{tpu_custom_call.1} parent=1 // pred_region
      %s33 = sadd.s32 0, 0
      %s34 = smul.u32 2, %s33
      %s36 = ssub.s32 256, 256
      %37 = vsyncadd [#allocation6], %s36
      %s38 = smul.addr %s34, 128
      %s39 = scalar_lea.hbm %s1, %s38
      %s40 = sshll.u32 [#allocation5], 4
      %s41 = int_to_ptr.vmem [resolvable:$true] %s40
      %46 = dma.hbm_to_vmem [thread:$0]  %s39, 256, %s41, [#allocation6], 128, 128, 8
    $region9: #{tpu_custom_call.1} parent=1 // pred_fallthru
      _
    // Predicated region
    $region10: #{tpu_custom_call.1} parent=1 // pred_check
      _
    $region11: #{tpu_custom_call.1} parent=1 // pred_check_branch
      %48 = sbr.rel (0) target = $region13
    $region12: #{tpu_custom_call.1} parent=1 // pred_region
      %s49 = sadd.s32 0, 0
      %s50 = smul.u32 2, %s49
      %s52 = ssub.s32 64, 64
      %53 = vsyncadd [#allocation6], %s52
      %s54 = smul.addr %s50, 32
      %s55 = scalar_lea.hbm %s2, %s54
      %s56 = sshll.u32 [#allocation7], 4
      %s57 = int_to_ptr.vmem [resolvable:$true] %s56
      %62 = dma.hbm_to_vmem [thread:$0]  %s55, 64, %s57, [#allocation6], 32, 32, 2
    $region13: #{tpu_custom_call.1} parent=1 // pred_fallthru
      _
    // Predicated region
    $region14: #{tpu_custom_call.1} parent=1 // pred_check
      _
    $region15: #{tpu_custom_call.1} parent=1 // pred_check_branch
      %64 = sbr.rel (0) target = $region17
    $region16: #{tpu_custom_call.1} parent=1 // pred_region
      %s65 = sadd.s32 0, 0
      %s66 = smul.u32 2, %s65
      %s68 = ssub.s32 256, 256
      %69 = vsyncadd [#allocation9], %s68
      %s70 = smul.addr %s66, 128
      %s71 = scalar_lea.hbm %s3, %s70
      %s72 = sshll.u32 [#allocation8], 4
      %s73 = int_to_ptr.vmem [resolvable:$true] %s72
      %78 = dma.hbm_to_vmem [thread:$0]  %s71, 256, %s73, [#allocation9], 128, 128, 8
    $region17: #{tpu_custom_call.1} parent=1 // pred_fallthru
      _
    // Predicated region
    $region18: #{tpu_custom_call.1} parent=1 // pred_check
      _
    $region19: #{tpu_custom_call.1} parent=1 // pred_check_branch
      %80 = sbr.rel (0) target = $region21
    $region20: #{tpu_custom_call.1} parent=1 // pred_region
      %s81 = sadd.s32 0, 0
      %s82 = smul.u32 2, %s81
      %s84 = ssub.s32 256, 256
      %85 = vsyncadd [#allocation9], %s84
      %s86 = smul.addr %s82, 128
      %s87 = scalar_lea.hbm %s4, %s86
      %s88 = sshll.u32 [#allocation10], 4
      %s89 = int_to_ptr.vmem [resolvable:$true] %s88
      %94 = dma.hbm_to_vmem [thread:$0]  %s87, 256, %s89, [#allocation9], 128, 128, 8
    $region21: #{tpu_custom_call.1} parent=1 // pred_fallthru
      _
    // Predicated region
    $region22: #{tpu_custom_call.1} parent=1 // pred_check
      _
    $region23: #{tpu_custom_call.1} parent=1 // pred_check_branch
      %96 = sbr.rel (0) target = $region25
    $region24: #{tpu_custom_call.1} parent=1 // pred_region
      %s97 = sadd.s32 0, 0
      %s98 = smul.u32 2, %s97
      %p99 = scmp.lt.s32.totalorder %s98, 1
      %s100 = scalar_select %p99, %s98, 1
      %s101 = smul.addr %s100, 2
      %s102 = scalar_lea.vmem %s5, %s101
      %s103 = sadd.s32 0, 0
      %s104 = smul.u32 2, %s103
    $region25: #{tpu_custom_call.1} parent=1 // pred_fallthru
      _
    // Predicated region
    $region26: #{tpu_custom_call.1} parent=1 // pred_check
      _
    $region27: #{tpu_custom_call.1} parent=1 // pred_check_branch
      %106 = sbr.rel (0) target = $region29
    $region28: #{tpu_custom_call.1} parent=1 // pred_region
      %107 = dma.done [#allocation3], 256
    $region29: #{tpu_custom_call.1} parent=1 // pred_fallthru
      _
    // Predicated region
    $region30: #{tpu_custom_call.1} parent=1 // pred_check
      _
    $region31: #{tpu_custom_call.1} parent=1 // pred_check_branch
      %109 = sbr.rel (0) target = $region33
    $region32: #{tpu_custom_call.1} parent=1 // pred_region
      %110 = dma.done [#allocation6], 256
    $region33: #{tpu_custom_call.1} parent=1 // pred_fallthru
      _
    // Predicated region
    $region34: #{tpu_custom_call.1} parent=1 // pred_check
      _
    $region35: #{tpu_custom_call.1} parent=1 // pred_check_branch
      %112 = sbr.rel (0) target = $region37
    $region36: #{tpu_custom_call.1} parent=1 // pred_region
      %113 = dma.done [#allocation6], 64
    $region37: #{tpu_custom_call.1} parent=1 // pred_fallthru
      _
    // Predicated region
    $region38: #{tpu_custom_call.1} parent=1 // pred_check
      _
    $region39: #{tpu_custom_call.1} parent=1 // pred_check_branch
      %115 = sbr.rel (0) target = $region41
    $region40: #{tpu_custom_call.1} parent=1 // pred_region
      %116 = dma.done [#allocation9], 256
    $region41: #{tpu_custom_call.1} parent=1 // pred_fallthru
      _
    // Predicated region
    $region42: #{tpu_custom_call.1} parent=1 // pred_check
      _
    $region43: #{tpu_custom_call.1} parent=1 // pred_check_branch
      %118 = sbr.rel (0) target = $region45
    $region44: #{tpu_custom_call.1} parent=1 // pred_region
      %119 = dma.done [#allocation9], 256
    $region45: #{tpu_custom_call.1} parent=1 // pred_fallthru
      _
    %s120 = sadd.s32 0, 0
    %s121 = smul.u32 2, %s120
    %p122 = scmp.lt.s32.totalorder %s121, 1
    %s123 = scalar_select %p122, %s121, 1
    %s124 = smul.addr %s123, 2
    %s125 = scalar_lea.vmem %s5, %s124
    %s126 = sadd.s32 0, 0
    %s127 = smul.u32 2, %s126
    %s128 = sadd.s32 0, 0
    %s129 = smul.u32 2, %s128
    %s130 = sadd.s32 0, 0
    %s131 = smul.u32 2, %s130
    %s132 = sadd.s32 0, 0
    %s133 = smul.u32 2, %s132
    %s134 = sadd.s32 0, 0
    %s135 = smul.u32 2, %s134
    %s136 = sadd.s32 0, 0
    %s137 = smul.u32 2, %s136
    %p138 = scmp.lt.s32.totalorder %s137, 1
    %s139 = scalar_select %p138, %s137, 1
    %s140 = smul.addr %s139, 2
    %s141 = scalar_lea.vmem %s5, %s140
    %s142 = sadd.s32 0, 0
    %s143 = smul.u32 2, %s142
    %p144 = scmp.eq.s32.totalorder 0, 0
    // Predicated region
    $region46: #{tpu_custom_call.1} parent=1 // pred_check
      %p145 = pneg %p144
    $region47: #{tpu_custom_call.1} parent=1 // pred_check_branch
      %147 = sbr.rel (%p145) target = $region49
    $region48: #{tpu_custom_call.1} parent=1 // pred_region
      %148 = vst [vmem:[#allocation11] sm:$0xff] 0.0
      %149 = vst [vmem:[#allocation11 + $0x8] sm:$0xff] 0.0
      %150 = vst [vmem:[#allocation11 + $0x10] sm:$0xff] 0.0
      %151 = vst [vmem:[#allocation11 + $0x18] sm:$0xff] 0.0
    $region49: #{tpu_custom_call.1} parent=1 // pred_fallthru
      _
    %v152 = vld [vmem:[#allocation2] sm:$0xff]
    %v153 = vld [vmem:[#allocation2 + $0x8] sm:$0xff]
    %v154 = vld [vmem:[#allocation5] sm:$0xff]
    %v155 = vld [vmem:[#allocation5 + $0x8] sm:$0xff]
    %v156 = vsub.f32 %v152, %v154
    %v157 = vsub.f32 %v153, %v155
    %v158 = vld [vmem:[#allocation7] sm:$0x3]
    %v159 = vld [vmem:[#allocation7 + $0x2] sm:$0x3]
    %v160 = vunpack.c.0.s8 %v158
    %v161 = vunpack.c.0.s8 %v159
    %v162 = vcvt.s32.f32 %v160
    %v163 = vcvt.s32.f32 %v161
    %v164 = vmul.f32 %v156, %v162
    %v165 = vmul.f32 %v157, %v163
    %v166 = vmul.f32 %v154, %v162
    %v167 = vmul.f32 %v155, %v163
    %v168 = vmul.f32 %v164, %v164
    %v169 = vmul.f32 %v165, %v165
    %v170 = vadd.f32 %v168, %v169
    %v171 = vmul.f32 %v166, %v166
    %v172 = vmul.f32 %v167, %v167
    %v173 = vadd.f32 %v171, %v172
    %v174 = vld [vmem:[#allocation11] sm:$0xff]
    %v175 = vadd.f32 %v174, %v170
    %176 = vst [vmem:[#allocation11] sm:$0xff] %v175
    %s177 = scalar_lea.vmem [#allocation11], 8
    %v178 = vld [vmem:[%s177] sm:$0xff]
    %v179 = vadd.f32 %v178, %v173
    %180 = vst [vmem:[%s177] sm:$0xff] %v179
    %v181 = vld [vmem:[#allocation8] sm:$0xff]
    %v182 = vld [vmem:[#allocation8 + $0x8] sm:$0xff]
    %v183 = vld [vmem:[#allocation10] sm:$0xff]
    %v184 = vld [vmem:[#allocation10 + $0x8] sm:$0xff]
    %v185 = vsub.f32 %v181, %v183
    %v186 = vsub.f32 %v182, %v184
    %v187 = vld [vmem:[%s141] sm:$0x3]
    %v188 = vld [vmem:[%s141 + $0x2] sm:$0x3]
    %v189 = vunpack.c.0.s8 %v187
    %v190 = vunpack.c.0.s8 %v188
    %v191 = vcvt.s32.f32 %v189
    %v192 = vcvt.s32.f32 %v190
    %v193 = vmul.f32 %v185, %v191
    %v194 = vmul.f32 %v186, %v192
    %v195 = vmul.f32 %v183, %v191
    %v196 = vmul.f32 %v184, %v192
    %v197 = vmul.f32 %v193, %v193
    %v198 = vmul.f32 %v194, %v194
    %v199 = vadd.f32 %v197, %v198
    %v200 = vmul.f32 %v195, %v195
    %v201 = vmul.f32 %v196, %v196
    %v202 = vadd.f32 %v200, %v201
    %s203 = scalar_lea.vmem [#allocation11], 16
    %v204 = vld [vmem:[%s203] sm:$0xff]
    %v205 = vadd.f32 %v204, %v199
    %206 = vst [vmem:[%s203] sm:$0xff] %v205
    %s207 = scalar_lea.vmem [#allocation11], 24
    %v208 = vld [vmem:[%s207] sm:$0xff]
    %v209 = vadd.f32 %v208, %v202
    %210 = vst [vmem:[%s207] sm:$0xff] %v209
    // Predicated region
    $region50: #{tpu_custom_call.1} parent=1 // pred_check
      _
    $region51: #{tpu_custom_call.1} parent=1 // pred_check_branch
      %212 = sbr.rel (0) target = $region53
    $region52: #{tpu_custom_call.1} parent=1 // pred_region
      %s214 = ssub.s32 512, 512
      %215 = vsyncadd [#allocation4], %s214
      %s216 = sshll.u32 [#allocation11], 4
      %s217 = int_to_ptr.vmem [resolvable:$true] %s216
      %222 = dma.vmem_to_hbm [thread:$0]  %s217, 512, %s6, [#allocation4], 128, 128, 8
    $region53: #{tpu_custom_call.1} parent=1 // pred_fallthru
      _
    // Predicated region
    $region54: #{tpu_custom_call.1} parent=1 // pred_check
      _
    $region55: #{tpu_custom_call.1} parent=1 // pred_check_branch
      %224 = sbr.rel (0) target = $region57
    $region56: #{tpu_custom_call.1} parent=1 // pred_region
      %225 = dma.done [#allocation4], 512
    $region57: #{tpu_custom_call.1} parent=1 // pred_fallthru
      _
    %226 = vsyncpa [#allocation3], 1
    %227 = vsyncpa [#allocation6], 1
    %228 = vsyncpa [#allocation9], 1
    %229 = vsyncpa [#allocation4], 1

</llo_original>
